<compile_context>
chip_gen: v6e
topology: v6e:2x2x1
jax: 0.10.0
libtpu: 0.0.40
codegen_flags: <defaults>
</compile_context>

<pallas_src>
import math

import jax
import jax.numpy as jnp
from jax.experimental import pallas as pl
from jax.experimental.pallas import tpu as pltpu

LANE = 128  # TPU lane width; pad feature dims to this for lane-dense stores.


def mlp_kernel(x_ref, w1_ref, b1_ref, w2_ref, b2_ref, w3_ref, b3_ref, o_ref):
    # One batch tile per grid step; all three matmuls + ReLUs fused in VMEM.
    x = x_ref[...]
    b1 = b1_ref[...]
    b2 = b2_ref[...]
    b3 = b3_ref[...]
    h1 = jnp.dot(x, w1_ref[...], preferred_element_type=jnp.float32) + b1
    h1 = jnp.maximum(h1, 0.0)
    h2 = jnp.dot(h1, w2_ref[...], preferred_element_type=jnp.float32) + b2
    h2 = jnp.maximum(h2, 0.0)
    out = jnp.dot(h2, w3_ref[...], preferred_element_type=jnp.float32) + b3
    o_ref[...] = out.astype(o_ref.dtype)


def perceptron_forward(x, params, out_dim, *, tile_b=1024):
    """x: (B, in_dim) float32.  params: lane-padded w1,b1,w2,b2,w3,b3 (see init_params).
    Returns (B, out_dim) float32."""
    w1, b1, w2, b2, w3, b3 = (params["w1"], params["b1"], params["w2"],
                              params["b2"], params["w3"], params["b3"])
    B, in_dim = x.shape
    out_pad = w3.shape[1]  # lane-padded (multiple of 128)

    # Batch tile: multiple of 8 sublanes, capped at tile_b; pad batch to whole tiles.
    tb = max(8, min(tile_b, ((B + 7) // 8) * 8))
    tb = (tb // 8) * 8
    b_pad = ((B + tb - 1) // tb) * tb
    if b_pad != B:
        x = jnp.pad(x, ((0, b_pad - B), (0, 0)))

    grid = (b_pad // tb,)
    x_spec = pl.BlockSpec((tb, in_dim), lambda i: (i, 0))
    out_spec = pl.BlockSpec((tb, out_pad), lambda i: (i, 0))
    # Weights/biases: one full-array block with a constant index map -> stays
    # resident in VMEM across all grid steps (no per-step re-DMA).
    const = lambda a: pl.BlockSpec(a.shape, lambda i: (0,) * a.ndim)

    out = pl.pallas_call(
        mlp_kernel,
        out_shape=jax.ShapeDtypeStruct((b_pad, out_pad), x.dtype),
        grid=grid,
        in_specs=[x_spec, const(w1), const(b1), const(w2), const(b2),
                  const(w3), const(b3)],
        out_specs=out_spec,
        compiler_params=pltpu.CompilerParams(
            dimension_semantics=("parallel",)),
    )(x, w1, b1, w2, b2, w3, b3)

    # Slice off batch padding and the zero-padded output lanes.
    return out[:B, :out_dim]


def init_params(key, in_dim, out_dim):
    """nn.Linear-style uniform(-1/sqrt(fan_in), 1/sqrt(fan_in)) init.

    Stores two copies: lane-padded (w*, b*) used by the kernel (padding is
    zero-initialized so results are exact), and raw (w*_raw, b*_raw) for the
    pure-JAX reference."""
    dims = [(in_dim, 20), (20, 10), (10, out_dim)]
    params = {}
    for i, (fan_in, fan_out) in enumerate(dims, start=1):
        key, kw, kb = jax.random.split(key, 3)
        bound = 1.0 / math.sqrt(fan_in)
        w = jax.random.uniform(kw, (fan_in, fan_out), jnp.float32,
                               minval=-bound, maxval=bound)
        b = jax.random.uniform(kb, (1, fan_out), jnp.float32,
                               minval=-bound, maxval=bound)
        # Input rows of layer 1 match x's real in_dim; deeper layers consume the
        # previous layer's 128-lane-padded activations.  Output cols -> 128 lanes.
        fan_in_pad = fan_in if i == 1 else LANE * ((dims[i - 2][1] + LANE - 1) // LANE)
        fan_out_pad = LANE * ((fan_out + LANE - 1) // LANE)
        params[f"w{i}"] = (jnp.zeros((fan_in_pad, fan_out_pad), jnp.float32)
                           .at[:fan_in, :fan_out].set(w))
        params[f"b{i}"] = (jnp.zeros((1, fan_out_pad), jnp.float32)
                           .at[:, :fan_out].set(b))
        params[f"w{i}_raw"] = w
        params[f"b{i}_raw"] = b
    return params


def reference_forward(x, p):
    h1 = jnp.maximum(x @ p["w1_raw"] + p["b1_raw"], 0.0)
    h2 = jnp.maximum(h1 @ p["w2_raw"] + p["b2_raw"], 0.0)
    return h2 @ p["w3_raw"] + p["b3_raw"]


if __name__ == "__main__":
    key = jax.random.PRNGKey(0)
    batch, in_dim, out_dim = 8, 32, 4

    key, kx = jax.random.split(key)
    x = jax.random.normal(kx, (batch, in_dim), jnp.float32)
    params = init_params(key, in_dim, out_dim)

    out = perceptron_forward(x, params, out_dim)
    out = jax.block_until_ready(out)

    ref = reference_forward(x, params)
    assert out.shape == (batch, out_dim)
    assert jnp.allclose(out, ref, atol=1e-5, rtol=1e-5), "mismatch vs reference"

    print("KERNEL_OK")
</pallas_src>

<mosaic_0001>
module attributes {stable_mosaic.version = 11 : i64} {
  func.func @mlp_kernel(%arg0: i32, %arg1: memref<8x32xf32, #tpu.memory_space<vmem>>, %arg2: memref<32x128xf32, #tpu.memory_space<vmem>>, %arg3: memref<1x128xf32, #tpu.memory_space<vmem>>, %arg4: memref<128x128xf32, #tpu.memory_space<vmem>>, %arg5: memref<1x128xf32, #tpu.memory_space<vmem>>, %arg6: memref<128x128xf32, #tpu.memory_space<vmem>>, %arg7: memref<1x128xf32, #tpu.memory_space<vmem>>, %arg8: memref<8x128xf32, #tpu.memory_space<vmem>>) attributes {dimension_semantics = [#tpu.dimension_semantics<parallel>], iteration_bounds = array<i64: 1>, scalar_prefetch = 0 : i64, scratch_operands = 0 : i64, tpu.core_type = #tpu.core_type<tc>, window_params = [{transform_indices = @transform_0, window_bounds = array<i64: 8, 32>}, {pipeline_mode = #tpu.pipeline_mode<synchronous>, transform_indices = @transform_1, window_bounds = array<i64: 32, 128>}, {pipeline_mode = #tpu.pipeline_mode<synchronous>, transform_indices = @transform_2, window_bounds = array<i64: 1, 128>}, {pipeline_mode = #tpu.pipeline_mode<synchronous>, transform_indices = @transform_3, window_bounds = array<i64: 128, 128>}, {pipeline_mode = #tpu.pipeline_mode<synchronous>, transform_indices = @transform_4, window_bounds = array<i64: 1, 128>}, {pipeline_mode = #tpu.pipeline_mode<synchronous>, transform_indices = @transform_5, window_bounds = array<i64: 128, 128>}, {pipeline_mode = #tpu.pipeline_mode<synchronous>, transform_indices = @transform_6, window_bounds = array<i64: 1, 128>}, {transform_indices = @transform_7, window_bounds = array<i64: 8, 128>}]} {
    %c0 = arith.constant 0 : index
    %c0_0 = arith.constant 0 : index
    %0 = vector.load %arg1[%c0, %c0_0] : memref<8x32xf32, #tpu.memory_space<vmem>>, vector<8x32xf32>
    %c0_1 = arith.constant 0 : index
    %c0_2 = arith.constant 0 : index
    %1 = vector.load %arg3[%c0_1, %c0_2] : memref<1x128xf32, #tpu.memory_space<vmem>>, vector<1x128xf32>
    %c0_3 = arith.constant 0 : index
    %c0_4 = arith.constant 0 : index
    %2 = vector.load %arg5[%c0_3, %c0_4] : memref<1x128xf32, #tpu.memory_space<vmem>>, vector<1x128xf32>
    %c0_5 = arith.constant 0 : index
    %c0_6 = arith.constant 0 : index
    %3 = vector.load %arg7[%c0_5, %c0_6] : memref<1x128xf32, #tpu.memory_space<vmem>>, vector<1x128xf32>
    %c0_7 = arith.constant 0 : index
    %c0_8 = arith.constant 0 : index
    %4 = vector.load %arg2[%c0_7, %c0_8] : memref<32x128xf32, #tpu.memory_space<vmem>>, vector<32x128xf32>
    %cst = arith.constant dense<0.000000e+00> : vector<8x128xf32>
    %5 = tpu.matmul %0, %4, %cst {dimension_numbers = #tpu.dot_dimension_numbers<[1], [0], [0], [1], [0, 0, 1, 1], [], []>} : vector<8x32xf32>, vector<32x128xf32>, vector<8x128xf32> -> vector<8x128xf32>
    %6 = vector.broadcast %1 : vector<1x128xf32> to vector<8x128xf32>
    %7 = arith.addf %5, %6 : vector<8x128xf32>
    %cst_9 = arith.constant 0.000000e+00 : f32
    %8 = vector.broadcast %cst_9 : f32 to vector<8x128xf32>
    %9 = arith.maximumf %7, %8 : vector<8x128xf32>
    %c0_10 = arith.constant 0 : index
    %c0_11 = arith.constant 0 : index
    %10 = vector.load %arg4[%c0_10, %c0_11] : memref<128x128xf32, #tpu.memory_space<vmem>>, vector<128x128xf32>
    %cst_12 = arith.constant dense<0.000000e+00> : vector<8x128xf32>
    %11 = tpu.matmul %9, %10, %cst_12 {dimension_numbers = #tpu.dot_dimension_numbers<[1], [0], [0], [1], [0, 0, 1, 1], [], []>} : vector<8x128xf32>, vector<128x128xf32>, vector<8x128xf32> -> vector<8x128xf32>
    %12 = vector.broadcast %2 : vector<1x128xf32> to vector<8x128xf32>
    %13 = arith.addf %11, %12 : vector<8x128xf32>
    %cst_13 = arith.constant 0.000000e+00 : f32
    %14 = vector.broadcast %cst_13 : f32 to vector<8x128xf32>
    %15 = arith.maximumf %13, %14 : vector<8x128xf32>
    %c0_14 = arith.constant 0 : index
    %c0_15 = arith.constant 0 : index
    %16 = vector.load %arg6[%c0_14, %c0_15] : memref<128x128xf32, #tpu.memory_space<vmem>>, vector<128x128xf32>
    %cst_16 = arith.constant dense<0.000000e+00> : vector<8x128xf32>
    %17 = tpu.matmul %15, %16, %cst_16 {dimension_numbers = #tpu.dot_dimension_numbers<[1], [0], [0], [1], [0, 0, 1, 1], [], []>} : vector<8x128xf32>, vector<128x128xf32>, vector<8x128xf32> -> vector<8x128xf32>
    %18 = vector.broadcast %3 : vector<1x128xf32> to vector<8x128xf32>
    %19 = arith.addf %17, %18 : vector<8x128xf32>
    %c0_17 = arith.constant 0 : index
    %c0_18 = arith.constant 0 : index
    %20 = vector.load %arg8[%c0_17, %c0_18] : memref<8x128xf32, #tpu.memory_space<vmem>>, vector<8x128xf32>
    tpu.vector_store %arg8[%c0_17, %c0_18], %19 {strides = array<i32>} : memref<8x128xf32, #tpu.memory_space<vmem>>, vector<8x128xf32>,
    return
  }
  func.func @transform_0(%arg0: i32) -> (i32, i32) {
    %c0_i32 = arith.constant 0 : i32
    %c0_i32_0 = arith.constant 0 : i32
    return %arg0, %c0_i32 : i32, i32
  }
  func.func @transform_1(%arg0: i32) -> (i32, i32) {
    %c0_i32 = arith.constant 0 : i32
    %c0_i32_0 = arith.constant 0 : i32
    %c0_i32_1 = arith.constant 0 : i32
    return %c0_i32, %c0_i32_0 : i32, i32
  }
  func.func @transform_2(%arg0: i32) -> (i32, i32) {
    %c0_i32 = arith.constant 0 : i32
    %c0_i32_0 = arith.constant 0 : i32
    %c0_i32_1 = arith.constant 0 : i32
    return %c0_i32, %c0_i32_0 : i32, i32
  }
  func.func @transform_3(%arg0: i32) -> (i32, i32) {
    %c0_i32 = arith.constant 0 : i32
    %c0_i32_0 = arith.constant 0 : i32
    %c0_i32_1 = arith.constant 0 : i32
    return %c0_i32, %c0_i32_0 : i32, i32
  }
  func.func @transform_4(%arg0: i32) -> (i32, i32) {
    %c0_i32 = arith.constant 0 : i32
    %c0_i32_0 = arith.constant 0 : i32
    %c0_i32_1 = arith.constant 0 : i32
    return %c0_i32, %c0_i32_0 : i32, i32
  }
  func.func @transform_5(%arg0: i32) -> (i32, i32) {
    %c0_i32 = arith.constant 0 : i32
    %c0_i32_0 = arith.constant 0 : i32
    %c0_i32_1 = arith.constant 0 : i32
    return %c0_i32, %c0_i32_0 : i32, i32
  }
  func.func @transform_6(%arg0: i32) -> (i32, i32) {
    %c0_i32 = arith.constant 0 : i32
    %c0_i32_0 = arith.constant 0 : i32
    %c0_i32_1 = arith.constant 0 : i32
    return %c0_i32, %c0_i32_0 : i32, i32
  }
  func.func @transform_7(%arg0: i32) -> (i32, i32) {
    %c0_i32 = arith.constant 0 : i32
    %c0_i32_0 = arith.constant 0 : i32
    return %arg0, %c0_i32 : i32, i32
  }
}

</mosaic_0001>

<llo_original>
// kernel: tpu_custom_call.1
$region0: #{tpu_custom_call.1}
  #allocation0 [shape = 'u32[]', space=smem, size = 0x4, offset = 0x4, fixed_abs, tag = 'smem constant byte address 0x4 - core index']
  #allocation1 [shape = 'u32[144,128]{1,0:T(1,128)}', space=vmem, size = 0x12000, scoped, tag = 'internal scratch']
  %s0 = inlined_call_operand.hbm [shape: f32[8,32], index: 0, kind: input, shape index: {}]
  %s1 = inlined_call_operand.hbm [shape: f32[32,128], index: 1, kind: input, shape index: {}]
  %s2 = inlined_call_operand.vmem [shape: f32[1,128], index: 2, kind: input, shape index: {}]
  %s3 = inlined_call_operand.hbm [shape: f32[128,128], index: 3, kind: input, shape index: {}]
  %s4 = inlined_call_operand.vmem [shape: f32[1,128], index: 4, kind: input, shape index: {}]
  %s5 = inlined_call_operand.hbm [shape: f32[128,128], index: 5, kind: input, shape index: {}]
  %s6 = inlined_call_operand.vmem [shape: f32[1,128], index: 6, kind: input, shape index: {}]
  %s7 = inlined_call_operand.hbm [shape: f32[8,128], index: 7, kind: output, shape index: {}]
  %s8 = sld [smem:[#allocation0]]
  $region54: #{tpu_custom_call.1} parent=0
    _
  %s10 = ssub.s32 1, %s8
  %s11 = scalar_select 0, %s10, %s8
  $region1: #{tpu_custom_call.1} parent=0
    #allocation2 [shape = 'u8[4096]{0}', space=vmem, size = 0x1000, scoped, tag = 'input window, operand 0, single buffered']
    #allocation3 [shape = 's32[1]{0}', space=sflag, size = 0x4, scoped, tag = 'scoped memory for tpu_custom_call.1']
    #allocation4 [shape = 's32[1]{0}', space=sflag, size = 0x4, scoped, tag = 'scoped memory for tpu_custom_call.1']
    #allocation5 [shape = 'u8[16384]{0}', space=vmem, size = 0x4000, scoped, tag = 'input window, operand 1, single buffered']
    #allocation6 [shape = 's32[1]{0}', space=sflag, size = 0x4, scoped, tag = 'scoped memory for tpu_custom_call.1']
    #allocation7 [shape = 'u8[65536]{0}', space=vmem, size = 0x10000, scoped, tag = 'input window, operand 3, single buffered']
    #allocation8 [shape = 'u8[65536]{0}', space=vmem, size = 0x10000, scoped, tag = 'input window, operand 5, single buffered']
    #allocation9 [shape = 's32[1]{0}', space=sflag, size = 0x4, scoped, tag = 'scoped memory for tpu_custom_call.1']
    #allocation10 [shape = 'u8[4096]{0}', space=vmem, size = 0x1000, scoped, tag = 'output window, operand 0, single buffered']
    %12 = vsyncpa [#allocation3], 0
    %13 = vsyncpa [#allocation6], 0
    %14 = vsyncpa [#allocation9], 0
    %15 = vsyncpa [#allocation4], 0
    // Predicated region
    $region2: #{tpu_custom_call.1} parent=1 // pred_check
      _
    $region3: #{tpu_custom_call.1} parent=1 // pred_check_branch
      %17 = sbr.rel (0) target = $region5
    $region4: #{tpu_custom_call.1} parent=1 // pred_region
      %s19 = ssub.s32 128, 128
      %20 = vsyncadd [#allocation3], %s19
      %s22 = sshll.u32 [#allocation2], 4
      %s23 = int_to_ptr.vmem [resolvable:$true] %s22
      %25 = dma.hbm_to_vmem [thread:$0]  %s0, 128, %s23, [#allocation3]
    $region5: #{tpu_custom_call.1} parent=1 // pred_fallthru
      _
    // Predicated region
    $region6: #{tpu_custom_call.1} parent=1 // pred_check
      _
    $region7: #{tpu_custom_call.1} parent=1 // pred_check_branch
      %27 = sbr.rel (0) target = $region9
    $region8: #{tpu_custom_call.1} parent=1 // pred_region
      %s29 = ssub.s32 512, 512
      %30 = vsyncadd [#allocation6], %s29
      %s31 = sshll.u32 [#allocation5], 4
      %s32 = int_to_ptr.vmem [resolvable:$true] %s31
      %37 = dma.hbm_to_vmem [thread:$0]  %s1, 512, %s32, [#allocation6], 128, 128, 8
    $region9: #{tpu_custom_call.1} parent=1 // pred_fallthru
      _
    // Predicated region
    $region10: #{tpu_custom_call.1} parent=1 // pred_check
      _
    $region11: #{tpu_custom_call.1} parent=1 // pred_check_branch
      %39 = sbr.rel (0) target = $region13
    $region12: #{tpu_custom_call.1} parent=1 // pred_region
      _
    $region13: #{tpu_custom_call.1} parent=1 // pred_fallthru
      _
    // Predicated region
    $region14: #{tpu_custom_call.1} parent=1 // pred_check
      _
    $region15: #{tpu_custom_call.1} parent=1 // pred_check_branch
      %41 = sbr.rel (0) target = $region17
    $region16: #{tpu_custom_call.1} parent=1 // pred_region
      %s43 = ssub.s32 2048, 2048
      %44 = vsyncadd [#allocation6], %s43
      %s45 = sshll.u32 [#allocation7], 4
      %s46 = int_to_ptr.vmem [resolvable:$true] %s45
      %51 = dma.hbm_to_vmem [thread:$0]  %s3, 2048, %s46, [#allocation6], 128, 128, 8
    $region17: #{tpu_custom_call.1} parent=1 // pred_fallthru
      _
    // Predicated region
    $region18: #{tpu_custom_call.1} parent=1 // pred_check
      _
    $region19: #{tpu_custom_call.1} parent=1 // pred_check_branch
      %53 = sbr.rel (0) target = $region21
    $region20: #{tpu_custom_call.1} parent=1 // pred_region
      _
    $region21: #{tpu_custom_call.1} parent=1 // pred_fallthru
      _
    // Predicated region
    $region22: #{tpu_custom_call.1} parent=1 // pred_check
      _
    $region23: #{tpu_custom_call.1} parent=1 // pred_check_branch
      %55 = sbr.rel (0) target = $region25
    $region24: #{tpu_custom_call.1} parent=1 // pred_region
      %s57 = ssub.s32 2048, 2048
      %58 = vsyncadd [#allocation9], %s57
      %s59 = sshll.u32 [#allocation8], 4
      %s60 = int_to_ptr.vmem [resolvable:$true] %s59
      %65 = dma.hbm_to_vmem [thread:$0]  %s5, 2048, %s60, [#allocation9], 128, 128, 8
    $region25: #{tpu_custom_call.1} parent=1 // pred_fallthru
      _
    // Predicated region
    $region26: #{tpu_custom_call.1} parent=1 // pred_check
      _
    $region27: #{tpu_custom_call.1} parent=1 // pred_check_branch
      %67 = sbr.rel (0) target = $region29
    $region28: #{tpu_custom_call.1} parent=1 // pred_region
      _
    $region29: #{tpu_custom_call.1} parent=1 // pred_fallthru
      _
    // Predicated region
    $region30: #{tpu_custom_call.1} parent=1 // pred_check
      _
    $region31: #{tpu_custom_call.1} parent=1 // pred_check_branch
      %69 = sbr.rel (0) target = $region33
    $region32: #{tpu_custom_call.1} parent=1 // pred_region
      %70 = dma.done [#allocation3], 128
    $region33: #{tpu_custom_call.1} parent=1 // pred_fallthru
      _
    // Predicated region
    $region34: #{tpu_custom_call.1} parent=1 // pred_check
      _
    $region35: #{tpu_custom_call.1} parent=1 // pred_check_branch
      %72 = sbr.rel (0) target = $region37
    $region36: #{tpu_custom_call.1} parent=1 // pred_region
      %73 = dma.done [#allocation6], 512
    $region37: #{tpu_custom_call.1} parent=1 // pred_fallthru
      _
    // Predicated region
    $region38: #{tpu_custom_call.1} parent=1 // pred_check
      _
    $region39: #{tpu_custom_call.1} parent=1 // pred_check_branch
      %75 = sbr.rel (0) target = $region41
    $region40: #{tpu_custom_call.1} parent=1 // pred_region
      %76 = dma.done [#allocation6], 2048
    $region41: #{tpu_custom_call.1} parent=1 // pred_fallthru
      _
    // Predicated region
    $region42: #{tpu_custom_call.1} parent=1 // pred_check
      _
    $region43: #{tpu_custom_call.1} parent=1 // pred_check_branch
      %78 = sbr.rel (0) target = $region45
    $region44: #{tpu_custom_call.1} parent=1 // pred_region
      %79 = dma.done [#allocation9], 2048
    $region45: #{tpu_custom_call.1} parent=1 // pred_fallthru
      _
    %v80 = vld [vmem:[#allocation2] sm:$0xff]
    %v81 = vld [vmem:[%s2] sm:$0x1]
    %v82 = vld [vmem:[%s4] sm:$0x1]
    %v83 = vld [vmem:[%s6] sm:$0x1]
    %v84 = vld [vmem:[#allocation5] sm:$0xff]
    %v85 = vld [vmem:[#allocation5 + $0x8] sm:$0xff]
    %v86 = vld [vmem:[#allocation5 + $0x10] sm:$0xff]
    %v87 = vld [vmem:[#allocation5 + $0x18] sm:$0xff]
    %v89 = vlaneseq
    %v90 = vshrl.u32 %v89, 7
    %v91 = vsub.s32 0, %v90
    %v92 = vrot.slane %v81, %v91
    %vm94 = vcmask 261120
    %v96 = vsel %vm94, %v80, 0
    %98 = vmatprep.subr.mxu0 0.0
    %99 = vmatpush1.msra.mxu0 0.0
    %100 = vmatprep.subr.mxu0 0.0
    %101 = vmatpush1.msra.mxu0 0.0
    %102 = vmatprep.subr.mxu0 0.0
    %103 = vmatpush1.msra.mxu0 0.0
    %104 = vmatprep.subr.mxu0 0.0
    %105 = vmatpush1.msra.mxu0 0.0
    %106 = vmatprep.subr.mxu0 0.0
    %107 = vmatpush1.msra.mxu0 0.0
    %108 = vmatprep.subr.mxu0 0.0
    %109 = vmatpush1.msra.mxu0 0.0
    %110 = vmatprep.subr.mxu0 0.0
    %111 = vmatpush1.msra.mxu0 0.0
    %112 = vmatprep.subr.mxu0 0.0
    %113 = vmatpush1.msra.mxu0 0.0
    %114 = vmatprep.subr.mxu0 0.0
    %115 = vmatpush1.msra.mxu0 0.0
    %116 = vmatprep.subr.mxu0 0.0
    %117 = vmatpush1.msra.mxu0 0.0
    %118 = vmatprep.subr.mxu0 0.0
    %119 = vmatpush1.msra.mxu0 0.0
    %120 = vmatprep.subr.mxu0 0.0
    %121 = vmatpush1.msra.mxu0 0.0
    %122 = vmatprep.subr.mxu0 0.0
    %123 = vmatpush1.msra.mxu0 %v87
    %124 = vmatprep.subr.mxu0 0.0
    %125 = vmatpush1.msra.mxu0 %v86
    %126 = vmatprep.subr.mxu0 0.0
    %127 = vmatpush1.msra.mxu0 %v85
    %128 = vmatprep.subr.mxu0 0.0
    %129 = vmatpush1.msra.mxu0 %v84
    %130 = vmatprep.subr.mxu0 0.0
    %131 = vmatpush2.msra.mxu0 0.0
    %132 = vmatprep.subr.mxu0 0.0
    %133 = vmatpush2.msra.mxu0 0.0
    %134 = vmatprep.subr.mxu0 0.0
    %135 = vmatpush2.msra.mxu0 0.0
    %136 = vmatprep.subr.mxu0 0.0
    %137 = vmatpush2.msra.mxu0 0.0
    %138 = vmatprep.subr.mxu0 0.0
    %139 = vmatpush2.msra.mxu0 0.0
    %140 = vmatprep.subr.mxu0 0.0
    %141 = vmatpush2.msra.mxu0 0.0
    %142 = vmatprep.subr.mxu0 0.0
    %143 = vmatpush2.msra.mxu0 0.0
    %144 = vmatprep.subr.mxu0 0.0
    %145 = vmatpush2.msra.mxu0 0.0
    %146 = vmatprep.subr.mxu0 0.0
    %147 = vmatpush2.msra.mxu0 0.0
    %148 = vmatprep.subr.mxu0 0.0
    %149 = vmatpush2.msra.mxu0 0.0
    %150 = vmatprep.subr.mxu0 0.0
    %151 = vmatpush2.msra.mxu0 0.0
    %152 = vmatprep.subr.mxu0 0.0
    %153 = vmatpush2.msra.mxu0 0.0
    %154 = vmatprep.subr.mxu0 0.0
    %155 = vmatpush2.msra.mxu0 0.0
    %156 = vmatprep.subr.mxu0 0.0
    %157 = vmatpush2.msra.mxu0 0.0
    %158 = vmatprep.subr.mxu0 0.0
    %159 = vmatpush2.msra.mxu0 0.0
    %160 = vmatprep.subr.mxu0 0.0
    %161 = vmatpush2.msra.mxu0 0.0
    %162 = vmatprep.mubr.f32.mxu0 0.0
    %163 = vmatmul.mubr.f32.gmra.mxu0 %v96
    %v164 = vpop.f32.mrf.mxu0
    %v165 = vadd.f32 %v92, %v164
    %v166 = vpop.f32.mrf.mxu0
    %167 = vdwg.mxu0
    %v168 = vmax.f32 %v165, 0.0
    %v169 = vld [vmem:[#allocation7] sm:$0xff]
    %v170 = vld [vmem:[#allocation7 + $0x8] sm:$0xff]
    %v171 = vld [vmem:[#allocation7 + $0x10] sm:$0xff]
    %v172 = vld [vmem:[#allocation7 + $0x18] sm:$0xff]
    %v173 = vld [vmem:[#allocation7 + $0x20] sm:$0xff]
    %v174 = vld [vmem:[#allocation7 + $0x28] sm:$0xff]
    %v175 = vld [vmem:[#allocation7 + $0x30] sm:$0xff]
    %v176 = vld [vmem:[#allocation7 + $0x38] sm:$0xff]
    %v177 = vld [vmem:[#allocation7 + $0x40] sm:$0xff]
    %v178 = vld [vmem:[#allocation7 + $0x48] sm:$0xff]
    %v179 = vld [vmem:[#allocation7 + $0x50] sm:$0xff]
    %v180 = vld [vmem:[#allocation7 + $0x58] sm:$0xff]
    %v181 = vld [vmem:[#allocation7 + $0x60] sm:$0xff]
    %v182 = vld [vmem:[#allocation7 + $0x68] sm:$0xff]
    %v183 = vld [vmem:[#allocation7 + $0x70] sm:$0xff]
    %v184 = vld [vmem:[#allocation7 + $0x78] sm:$0xff]
    %v186 = vlaneseq
    %v187 = vshrl.u32 %v186, 7
    %v188 = vsub.s32 0, %v187
    %v189 = vrot.slane %v82, %v188
    %191 = vmatprep.subr.mxu0 0.0
    %192 = vmatpush1.msra.mxu0 %v184
    %193 = vmatprep.subr.mxu0 0.0
    %194 = vmatpush1.msra.mxu0 %v183
    %195 = vmatprep.subr.mxu0 0.0
    %196 = vmatpush1.msra.mxu0 %v182
    %197 = vmatprep.subr.mxu0 0.0
    %198 = vmatpush1.msra.mxu0 %v181
    %199 = vmatprep.subr.mxu0 0.0
    %200 = vmatpush1.msra.mxu0 %v180
    %201 = vmatprep.subr.mxu0 0.0
    %202 = vmatpush1.msra.mxu0 %v179
    %203 = vmatprep.subr.mxu0 0.0
    %204 = vmatpush1.msra.mxu0 %v178
    %205 = vmatprep.subr.mxu0 0.0
    %206 = vmatpush1.msra.mxu0 %v177
    %207 = vmatprep.subr.mxu0 0.0
    %208 = vmatpush1.msra.mxu0 %v176
    %209 = vmatprep.subr.mxu0 0.0
    %210 = vmatpush1.msra.mxu0 %v175
    %211 = vmatprep.subr.mxu0 0.0
    %212 = vmatpush1.msra.mxu0 %v174
    %213 = vmatprep.subr.mxu0 0.0
    %214 = vmatpush1.msra.mxu0 %v173
    %215 = vmatprep.subr.mxu0 0.0
    %216 = vmatpush1.msra.mxu0 %v172
    %217 = vmatprep.subr.mxu0 0.0
    %218 = vmatpush1.msra.mxu0 %v171
    %219 = vmatprep.subr.mxu0 0.0
    %220 = vmatpush1.msra.mxu0 %v170
    %221 = vmatprep.subr.mxu0 0.0
    %222 = vmatpush1.msra.mxu0 %v169
    %223 = vmatprep.subr.mxu0 0.0
    %224 = vmatpush2.msra.mxu0 0.0
    %225 = vmatprep.subr.mxu0 0.0
    %226 = vmatpush2.msra.mxu0 0.0
    %227 = vmatprep.subr.mxu0 0.0
    %228 = vmatpush2.msra.mxu0 0.0
    %229 = vmatprep.subr.mxu0 0.0
    %230 = vmatpush2.msra.mxu0 0.0
    %231 = vmatprep.subr.mxu0 0.0
    %232 = vmatpush2.msra.mxu0 0.0
    %233 = vmatprep.subr.mxu0 0.0
    %234 = vmatpush2.msra.mxu0 0.0
    %235 = vmatprep.subr.mxu0 0.0
    %236 = vmatpush2.msra.mxu0 0.0
    %237 = vmatprep.subr.mxu0 0.0
    %238 = vmatpush2.msra.mxu0 0.0
    %239 = vmatprep.subr.mxu0 0.0
    %240 = vmatpush2.msra.mxu0 0.0
    %241 = vmatprep.subr.mxu0 0.0
    %242 = vmatpush2.msra.mxu0 0.0
    %243 = vmatprep.subr.mxu0 0.0
    %244 = vmatpush2.msra.mxu0 0.0
    %245 = vmatprep.subr.mxu0 0.0
    %246 = vmatpush2.msra.mxu0 0.0
    %247 = vmatprep.subr.mxu0 0.0
    %248 = vmatpush2.msra.mxu0 0.0
    %249 = vmatprep.subr.mxu0 0.0
    %250 = vmatpush2.msra.mxu0 0.0
    %251 = vmatprep.subr.mxu0 0.0
    %252 = vmatpush2.msra.mxu0 0.0
    %253 = vmatprep.subr.mxu0 0.0
    %254 = vmatpush2.msra.mxu0 0.0
    %255 = vmatprep.mubr.f32.mxu0 0.0
    %256 = vmatmul.mubr.f32.gmra.mxu0 %v168
    %v257 = vpop.f32.mrf.mxu0
    %v258 = vadd.f32 %v189, %v257
    %v259 = vpop.f32.mrf.mxu0
    %260 = vdwg.mxu0
    %v261 = vmax.f32 %v258, 0.0
    %v262 = vld [vmem:[#allocation8] sm:$0xff]
    %v263 = vld [vmem:[#allocation8 + $0x8] sm:$0xff]
    %v264 = vld [vmem:[#allocation8 + $0x10] sm:$0xff]
    %v265 = vld [vmem:[#allocation8 + $0x18] sm:$0xff]
    %v266 = vld [vmem:[#allocation8 + $0x20] sm:$0xff]
    %v267 = vld [vmem:[#allocation8 + $0x28] sm:$0xff]
    %v268 = vld [vmem:[#allocation8 + $0x30] sm:$0xff]
    %v269 = vld [vmem:[#allocation8 + $0x38] sm:$0xff]
    %v270 = vld [vmem:[#allocation8 + $0x40] sm:$0xff]
    %v271 = vld [vmem:[#allocation8 + $0x48] sm:$0xff]
    %v272 = vld [vmem:[#allocation8 + $0x50] sm:$0xff]
    %v273 = vld [vmem:[#allocation8 + $0x58] sm:$0xff]
    %v274 = vld [vmem:[#allocation8 + $0x60] sm:$0xff]
    %v275 = vld [vmem:[#allocation8 + $0x68] sm:$0xff]
    %v276 = vld [vmem:[#allocation8 + $0x70] sm:$0xff]
    %v277 = vld [vmem:[#allocation8 + $0x78] sm:$0xff]
    %v279 = vlaneseq
    %v280 = vshrl.u32 %v279, 7
    %v281 = vsub.s32 0, %v280
    %v282 = vrot.slane %v83, %v281
    %284 = vmatprep.subr.mxu0 0.0
    %285 = vmatpush1.msra.mxu0 %v277
    %286 = vmatprep.subr.mxu0 0.0
    %287 = vmatpush1.msra.mxu0 %v276
    %288 = vmatprep.subr.mxu0 0.0
    %289 = vmatpush1.msra.mxu0 %v275
    %290 = vmatprep.subr.mxu0 0.0
    %291 = vmatpush1.msra.mxu0 %v274
    %292 = vmatprep.subr.mxu0 0.0
    %293 = vmatpush1.msra.mxu0 %v273
    %294 = vmatprep.subr.mxu0 0.0
    %295 = vmatpush1.msra.mxu0 %v272
    %296 = vmatprep.subr.mxu0 0.0
    %297 = vmatpush1.msra.mxu0 %v271
    %298 = vmatprep.subr.mxu0 0.0
    %299 = vmatpush1.msra.mxu0 %v270
    %300 = vmatprep.subr.mxu0 0.0
    %301 = vmatpush1.msra.mxu0 %v269
    %302 = vmatprep.subr.mxu0 0.0
    %303 = vmatpush1.msra.mxu0 %v268
    %304 = vmatprep.subr.mxu0 0.0
    %305 = vmatpush1.msra.mxu0 %v267
    %306 = vmatprep.subr.mxu0 0.0
    %307 = vmatpush1.msra.mxu0 %v266
    %308 = vmatprep.subr.mxu0 0.0
    %309 = vmatpush1.msra.mxu0 %v265
    %310 = vmatprep.subr.mxu0 0.0
    %311 = vmatpush1.msra.mxu0 %v264
    %312 = vmatprep.subr.mxu0 0.0
    %313 = vmatpush1.msra.mxu0 %v263
    %314 = vmatprep.subr.mxu0 0.0
    %315 = vmatpush1.msra.mxu0 %v262
    %316 = vmatprep.subr.mxu0 0.0
    %317 = vmatpush2.msra.mxu0 0.0
    %318 = vmatprep.subr.mxu0 0.0
    %319 = vmatpush2.msra.mxu0 0.0
    %320 = vmatprep.subr.mxu0 0.0
    %321 = vmatpush2.msra.mxu0 0.0
    %322 = vmatprep.subr.mxu0 0.0
    %323 = vmatpush2.msra.mxu0 0.0
    %324 = vmatprep.subr.mxu0 0.0
    %325 = vmatpush2.msra.mxu0 0.0
    %326 = vmatprep.subr.mxu0 0.0
    %327 = vmatpush2.msra.mxu0 0.0
    %328 = vmatprep.subr.mxu0 0.0
    %329 = vmatpush2.msra.mxu0 0.0
    %330 = vmatprep.subr.mxu0 0.0
    %331 = vmatpush2.msra.mxu0 0.0
    %332 = vmatprep.subr.mxu0 0.0
    %333 = vmatpush2.msra.mxu0 0.0
    %334 = vmatprep.subr.mxu0 0.0
    %335 = vmatpush2.msra.mxu0 0.0
    %336 = vmatprep.subr.mxu0 0.0
    %337 = vmatpush2.msra.mxu0 0.0
    %338 = vmatprep.subr.mxu0 0.0
    %339 = vmatpush2.msra.mxu0 0.0
    %340 = vmatprep.subr.mxu0 0.0
    %341 = vmatpush2.msra.mxu0 0.0
    %342 = vmatprep.subr.mxu0 0.0
    %343 = vmatpush2.msra.mxu0 0.0
    %344 = vmatprep.subr.mxu0 0.0
    %345 = vmatpush2.msra.mxu0 0.0
    %346 = vmatprep.subr.mxu0 0.0
    %347 = vmatpush2.msra.mxu0 0.0
    %348 = vmatprep.mubr.f32.mxu0 0.0
    %349 = vmatmul.mubr.f32.gmra.mxu0 %v261
    %v350 = vpop.f32.mrf.mxu0
    %v351 = vadd.f32 %v282, %v350
    %v352 = vpop.f32.mrf.mxu0
    %353 = vdwg.mxu0
    %354 = vst [vmem:[#allocation10] sm:$0xff] %v351
    // Predicated region
    $region46: #{tpu_custom_call.1} parent=1 // pred_check
      _
    $region47: #{tpu_custom_call.1} parent=1 // pred_check_branch
      %356 = sbr.rel (0) target = $region49
    $region48: #{tpu_custom_call.1} parent=1 // pred_region
      %s358 = ssub.s32 128, 128
      %359 = vsyncadd [#allocation4], %s358
      %s361 = sshll.u32 [#allocation10], 4
      %s362 = int_to_ptr.vmem [resolvable:$true] %s361
      %364 = dma.vmem_to_hbm [thread:$0]  %s362, 128, %s7, [#allocation4]
    $region49: #{tpu_custom_call.1} parent=1 // pred_fallthru
      _
    // Predicated region
    $region50: #{tpu_custom_call.1} parent=1 // pred_check
      _
    $region51: #{tpu_custom_call.1} parent=1 // pred_check_branch
      %366 = sbr.rel (0) target = $region53
    $region52: #{tpu_custom_call.1} parent=1 // pred_region
      %367 = dma.done [#allocation4], 128
    $region53: #{tpu_custom_call.1} parent=1 // pred_fallthru
      _
    %368 = vsyncpa [#allocation3], 1
    %369 = vsyncpa [#allocation6], 1
    %370 = vsyncpa [#allocation9], 1
    %371 = vsyncpa [#allocation4], 1

</llo_original>
